<compile_context>
chip_gen: v5e
topology: v5e:2x2
jax: 0.10.0
libtpu: 0.0.40
codegen_flags: <defaults>
</compile_context>

<pallas_src>
import functools

import jax
import jax.numpy as jnp
from jax.experimental import pallas as pl
from jax.experimental.pallas import tpu as pltpu


def _round_up(x, m):
    return (x + m - 1) // m * m


def _choose_tm(M, tm_max=1024):
    """Pick the M tile: big tiles to amortize per-step overhead, but keep at
    least 2 grid steps for moderate M so v7x's 2 TensorCores both get work
    (no-op on v5e/v6e). bf16 sublane pack -> multiples of 16 rows."""
    if M <= 256:
        return _round_up(M, 16)            # tiny input: single block
    return min(tm_max, _round_up((M + 1) // 2, 16))


# ----------------------------------------------------------------------------
# Pallas kernel: patch-projection GEMM + bias + optional fused LayerNorm
# ----------------------------------------------------------------------------
def _patch_embed_kernel(a_ref, w_ref, b_ref, *rest, apply_norm, eps):
    if apply_norm:
        g_ref, bt_ref, o_ref = rest
    else:
        (o_ref,) = rest

    # (tm, K) bf16 @ (K, N) bf16 -> f32 accumulation on the MXU.
    y = jnp.dot(a_ref[...], w_ref[...], preferred_element_type=jnp.float32)
    y = y + b_ref[...]                                   # conv bias

    if apply_norm:
        n = y.shape[-1]
        inv_n = 1.0 / n
        mean = jnp.sum(y, axis=-1, keepdims=True) * inv_n
        diff = y - mean                                  # stable two-pass LN
        var = jnp.sum(diff * diff, axis=-1, keepdims=True) * inv_n
        y = diff * jax.lax.rsqrt(var + eps) * g_ref[...] + bt_ref[...]

    o_ref[...] = y.astype(o_ref.dtype)                   # bf16 writeback


def patch_embed_matmul(patches_bf16, w_kn_bf16, bias, gamma=None, beta=None,
                       *, apply_norm, tm_max=1024, eps=1e-5):
    """patches (M,K) bf16 @ w (K,N) bf16 + bias, optional LayerNorm.
    Returns (M, N) bf16."""
    M, K = patches_bf16.shape
    _, N = w_kn_bf16.shape

    tm = _choose_tm(M, tm_max)
    Mp = _round_up(M, tm)
    A = patches_bf16 if Mp == M else jnp.pad(patches_bf16, ((0, Mp - M), (0, 0)))

    operands = [A, w_kn_bf16, bias.astype(jnp.float32).reshape(1, N)]
    in_specs = [
        pl.BlockSpec((tm, K), lambda i: (i, 0)),     # A tile per grid step
        pl.BlockSpec((K, N), lambda i: (0, 0)),      # weight VMEM-resident
        pl.BlockSpec((1, N), lambda i: (0, 0)),      # bias resident
    ]
    if apply_norm:
        operands += [gamma.astype(jnp.float32).reshape(1, N),
                     beta.astype(jnp.float32).reshape(1, N)]
        in_specs += [pl.BlockSpec((1, N), lambda i: (0, 0)),
                     pl.BlockSpec((1, N), lambda i: (0, 0))]

    kern = functools.partial(_patch_embed_kernel, apply_norm=apply_norm, eps=eps)
    out = pl.pallas_call(
        kern,
        out_shape=jax.ShapeDtypeStruct((Mp, N), jnp.bfloat16),
        grid_spec=pltpu.PrefetchScalarGridSpec(
            num_scalar_prefetch=0,
            grid=(Mp // tm,),
            in_specs=in_specs,
            # last dim == full array dim (96) -> allowed; avoids pad-to-128
            # plus the post-kernel lane slice (extra output HBM pass).
            out_specs=pl.BlockSpec((tm, N), lambda i: (i, 0)),
        ),
        compiler_params=pltpu.CompilerParams(
            dimension_semantics=("parallel",)),
    )(*operands)
    return out if Mp == M else out[:M]


# ----------------------------------------------------------------------------
# PatchEmbed forward (PyTorch semantics: NCHW in, (B, num_patches, embed) out)
# ----------------------------------------------------------------------------
@functools.partial(jax.jit, static_argnames=("patch_size", "apply_norm"))
def patch_embed_forward(x_nchw, params, *, patch_size, apply_norm=False):
    B, C, H, W = x_nchw.shape
    ps = patch_size
    assert H % ps == 0 and W % ps == 0, "image size must be divisible by patch size"
    Hp, Wp = H // ps, W // ps

    # Cast to bf16 BEFORE the patch rearrangement so the materialized patches
    # intermediate is half the bytes and the convert fuses into the transpose.
    # (c, kh, kw) fastest-varying to match Conv2d weight (O, C, kh, kw).reshape(O,-1).
    p = x_nchw.astype(jnp.bfloat16).reshape(B, C, Hp, ps, Wp, ps)
    patches = p.transpose(0, 2, 4, 1, 3, 5).reshape(B * Hp * Wp, C * ps * ps)
    # TODO(synk): for very large images, fuse patch extraction into the kernel
    # (image row-band BlockSpec) to drop this XLA HBM->HBM transpose pass.

    w = params["proj_w"]                                   # (embed, C, ps, ps)
    embed_dim = w.shape[0]
    w_kn = jnp.transpose(w.reshape(embed_dim, -1)).astype(jnp.bfloat16)  # (K, N)

    y = patch_embed_matmul(
        patches, w_kn, params["proj_b"],
        params.get("norm_g"), params.get("norm_b"),
        apply_norm=apply_norm)
    return y.reshape(B, Hp * Wp, embed_dim)                # bf16


# Pure-JAX reference (same bf16-input / f32-accumulation math) for validation.
def patch_embed_reference(x_nchw, params, *, patch_size, apply_norm=False, eps=1e-5):
    B, C, H, W = x_nchw.shape
    ps = patch_size
    Hp, Wp = H // ps, W // ps
    p = x_nchw.astype(jnp.float32).reshape(B, C, Hp, ps, Wp, ps)
    p = p.transpose(0, 2, 4, 1, 3, 5).reshape(B, Hp * Wp, C * ps * ps)
    w = params["proj_w"]
    w_kn = w.reshape(w.shape[0], -1).T
    y = jnp.dot(p.astype(jnp.bfloat16), w_kn.astype(jnp.bfloat16),
                preferred_element_type=jnp.float32) + params["proj_b"][None, None, :]
    if apply_norm:
        mean = y.mean(-1, keepdims=True)
        var = ((y - mean) ** 2).mean(-1, keepdims=True)
        y = (y - mean) * jax.lax.rsqrt(var + eps) * params["norm_g"] + params["norm_b"]
    return y


# ----------------------------------------------------------------------------
# Parameter init (deterministic; mirrors the PatchEmbed module structure)
# ----------------------------------------------------------------------------
def init_patch_embed_params(key, in_chans, embed_dim, patch_size, use_norm):
    k1, k2 = jax.random.split(key)
    fan_in = in_chans * patch_size * patch_size
    w = jax.random.normal(k1, (embed_dim, in_chans, patch_size, patch_size),
                          jnp.float32) / jnp.sqrt(fan_in)
    b = 0.01 * jax.random.normal(k2, (embed_dim,), jnp.float32)
    params = dict(proj_w=w, proj_b=b)
    if use_norm:  # PyTorch LayerNorm defaults: weight=1, bias=0
        params["norm_g"] = jnp.ones((embed_dim,), jnp.float32)
        params["norm_b"] = jnp.zeros((embed_dim,), jnp.float32)
    return params


# ----------------------------------------------------------------------------
# Main
# ----------------------------------------------------------------------------
if __name__ == "__main__":
    key = jax.random.PRNGKey(0)
    pk, xk1, xk2 = jax.random.split(key, 3)

    ps, cin, embed_dim = 4, 3, 96

    # Case 1: default PatchEmbed (norm_layer=None), small image -> M=32 rows.
    params = init_patch_embed_params(pk, cin, embed_dim, ps, use_norm=False)
    x1 = jax.random.normal(xk1, (2, cin, 16, 16), jnp.float32)
    out1 = jax.block_until_ready(
        patch_embed_forward(x1, params, patch_size=ps, apply_norm=False))
    assert out1.shape == (2, 16, embed_dim), out1.shape
    ref1 = patch_embed_reference(x1, params, patch_size=ps, apply_norm=False)
    assert float(jnp.max(jnp.abs(out1.astype(jnp.float32) - ref1))) < 5e-2

    # Case 2: norm_layer=nn.LayerNorm, larger image -> M=288 rows, 2 parallel
    # M tiles of 144 (exercises the multi-tile / 2-TensorCore path).
    params_n = init_patch_embed_params(jax.random.fold_in(pk, 1), cin, embed_dim,
                                       ps, use_norm=True)
    x2 = jax.random.normal(xk2, (2, cin, 48, 48), jnp.float32)
    out2 = jax.block_until_ready(
        patch_embed_forward(x2, params_n, patch_size=ps, apply_norm=True))
    assert out2.shape == (2, 144, embed_dim), out2.shape
    ref2 = patch_embed_reference(x2, params_n, patch_size=ps, apply_norm=True)
    assert float(jnp.max(jnp.abs(out2.astype(jnp.float32) - ref2))) < 5e-2

    assert bool(jnp.all(jnp.isfinite(out1.astype(jnp.float32))))
    assert bool(jnp.all(jnp.isfinite(out2.astype(jnp.float32))))
    print("KERNEL_OK")
</pallas_src>

<mosaic_0001>
module attributes {stable_mosaic.version = 11 : i64} {
  func.func @_patch_embed_kernel(%arg0: i32, %arg1: memref<32x48xbf16, #tpu.memory_space<vmem>>, %arg2: memref<48x96xbf16, #tpu.memory_space<vmem>>, %arg3: memref<1x96xf32, #tpu.memory_space<vmem>>, %arg4: memref<32x96xbf16, #tpu.memory_space<vmem>>) attributes {dimension_semantics = [#tpu.dimension_semantics<parallel>], iteration_bounds = array<i64: 1>, scalar_prefetch = 0 : i64, scratch_operands = 0 : i64, tpu.core_type = #tpu.core_type<tc>, window_params = [{transform_indices = @transform_0, window_bounds = array<i64: 32, 48>}, {pipeline_mode = #tpu.pipeline_mode<synchronous>, transform_indices = @transform_1, window_bounds = array<i64: 48, 96>}, {pipeline_mode = #tpu.pipeline_mode<synchronous>, transform_indices = @transform_2, window_bounds = array<i64: 1, 96>}, {transform_indices = @transform_3, window_bounds = array<i64: 32, 96>}]} {
    %c0 = arith.constant 0 : index
    %c0_0 = arith.constant 0 : index
    %0 = vector.load %arg1[%c0, %c0_0] : memref<32x48xbf16, #tpu.memory_space<vmem>>, vector<32x48xbf16>
    %c0_1 = arith.constant 0 : index
    %c0_2 = arith.constant 0 : index
    %1 = vector.load %arg2[%c0_1, %c0_2] : memref<48x96xbf16, #tpu.memory_space<vmem>>, vector<48x96xbf16>
    %cst = arith.constant dense<0.000000e+00> : vector<32x96xf32>
    %2 = tpu.matmul %0, %1, %cst {dimension_numbers = #tpu.dot_dimension_numbers<[1], [0], [0], [1], [0, 0, 1, 1], [], []>} : vector<32x48xbf16>, vector<48x96xbf16>, vector<32x96xf32> -> vector<32x96xf32>
    %c0_3 = arith.constant 0 : index
    %c0_4 = arith.constant 0 : index
    %3 = vector.load %arg3[%c0_3, %c0_4] : memref<1x96xf32, #tpu.memory_space<vmem>>, vector<1x96xf32>
    %4 = vector.broadcast %3 : vector<1x96xf32> to vector<32x96xf32>
    %5 = arith.addf %2, %4 : vector<32x96xf32>
    %6 = arith.truncf %5 : vector<32x96xf32> to vector<32x96xbf16>
    %c0_5 = arith.constant 0 : index
    %c0_6 = arith.constant 0 : index
    %7 = vector.load %arg4[%c0_5, %c0_6] : memref<32x96xbf16, #tpu.memory_space<vmem>>, vector<32x96xbf16>
    tpu.vector_store %arg4[%c0_5, %c0_6], %6 {strides = array<i32>} : memref<32x96xbf16, #tpu.memory_space<vmem>>, vector<32x96xbf16>,
    return
  }
  func.func @transform_0(%arg0: i32) -> (i32, i32) {
    %c0_i32 = arith.constant 0 : i32
    %c0_i32_0 = arith.constant 0 : i32
    return %arg0, %c0_i32 : i32, i32
  }
  func.func @transform_1(%arg0: i32) -> (i32, i32) {
    %c0_i32 = arith.constant 0 : i32
    %c0_i32_0 = arith.constant 0 : i32
    %c0_i32_1 = arith.constant 0 : i32
    return %c0_i32, %c0_i32_0 : i32, i32
  }
  func.func @transform_2(%arg0: i32) -> (i32, i32) {
    %c0_i32 = arith.constant 0 : i32
    %c0_i32_0 = arith.constant 0 : i32
    %c0_i32_1 = arith.constant 0 : i32
    return %c0_i32, %c0_i32_0 : i32, i32
  }
  func.func @transform_3(%arg0: i32) -> (i32, i32) {
    %c0_i32 = arith.constant 0 : i32
    %c0_i32_0 = arith.constant 0 : i32
    return %arg0, %c0_i32 : i32, i32
  }
}

</mosaic_0001>

<llo_original>
// kernel: patch_embed_forward.1
$region0: #{patch_embed_forward.1}
  #allocation0 [shape = 'u32[]', space=smem, size = 0x4, offset = 0x4, fixed_abs, tag = 'smem constant byte address 0x4 - core index']
  #allocation1 [shape = 'u32[72,128]{1,0:T(1,128)}', space=vmem, size = 0x9000, scoped, tag = 'internal scratch']
  %s0 = inlined_call_operand.vmem [shape: bf16[32,48], index: 0, kind: input, shape index: {}]
  %s1 = inlined_call_operand.vmem [shape: bf16[48,96], index: 1, kind: input, shape index: {}]
  %s2 = inlined_call_operand.vmem [shape: f32[1,96], index: 2, kind: input, shape index: {}]
  %s3 = inlined_call_operand.hbm [shape: bf16[32,96], index: 3, kind: output, shape index: {}]
  %s4 = sld [smem:[#allocation0]]
  $region22: #{patch_embed_forward.1} parent=0
    _
  %s6 = ssub.s32 1, %s4
  %s7 = scalar_select 0, %s6, %s4
  $region1: #{patch_embed_forward.1} parent=0
    #allocation2 [shape = 'u8[8192]{0}', space=vmem, size = 0x2000, scoped, tag = 'output window, operand 0, single buffered']
    #allocation3 [shape = 's32[1]{0}', space=sflag, size = 0x4, scoped, tag = 'scoped memory for patch_embed_forward.1']
    %8 = vsyncpa [#allocation3], 0
    // Predicated region
    $region2: #{patch_embed_forward.1} parent=1 // pred_check
      _
    $region3: #{patch_embed_forward.1} parent=1 // pred_check_branch
      %10 = sbr.rel (0) target = $region5
    $region4: #{patch_embed_forward.1} parent=1 // pred_region
      _
    $region5: #{patch_embed_forward.1} parent=1 // pred_fallthru
      _
    // Predicated region
    $region6: #{patch_embed_forward.1} parent=1 // pred_check
      _
    $region7: #{patch_embed_forward.1} parent=1 // pred_check_branch
      %12 = sbr.rel (0) target = $region9
    $region8: #{patch_embed_forward.1} parent=1 // pred_region
      _
    $region9: #{patch_embed_forward.1} parent=1 // pred_fallthru
      _
    // Predicated region
    $region10: #{patch_embed_forward.1} parent=1 // pred_check
      _
    $region11: #{patch_embed_forward.1} parent=1 // pred_check_branch
      %14 = sbr.rel (0) target = $region13
    $region12: #{patch_embed_forward.1} parent=1 // pred_region
      _
    $region13: #{patch_embed_forward.1} parent=1 // pred_fallthru
      _
    %v16 = vld [vmem:[%s0] sm:$0xf]
    %v17 = vld [vmem:[%s0 + $0x4] sm:$0xf]
    %v18 = vld [vmem:[%s0 + $0x8] sm:$0xf]
    %v19 = vld [vmem:[%s0 + $0xc] sm:$0xf]
    %v20 = vld [vmem:[%s1] sm:$0xf]
    %v21 = vld [vmem:[%s1 + $0x4] sm:$0xf]
    %v22 = vld [vmem:[%s1 + $0x8] sm:$0xf]
    %v23 = vld [vmem:[%s1 + $0xc] sm:$0xf]
    %v24 = vld [vmem:[%s1 + $0x10] sm:$0xf]
    %v25 = vld [vmem:[%s1 + $0x14] sm:$0xf]
    %v26 = vld [vmem:[%s2] sm:$0x1]
    %v28 = vperm.slane %v26, 0
    %v34 = vunpack.c.l.b16 %v16
    %v35 = vunpack.c.l.b16 %v17
    %v36 = vunpack.c.l.b16 %v18
    %v37 = vunpack.c.l.b16 %v19
    %v38 = vpack.c.b16 %v35, %v34
    %v39 = vpack.c.b16 %v37, %v36
    %v46 = vunpack.c.l.b16 %v20
    %v47 = vunpack.c.l.b16 %v21
    %v48 = vunpack.c.l.b16 %v22
    %v49 = vunpack.c.l.b16 %v23
    %v50 = vunpack.c.l.b16 %v24
    %v51 = vunpack.c.l.b16 %v25
    %v52 = vpack.c.b16 %v47, %v46
    %v53 = vpack.c.b16 %v49, %v48
    %v54 = vpack.c.b16 %v51, %v50
    %vm58 = vcmask 392192
    %v60 = vsel %vm58, %v38, 0
    %v63 = vsel %vm58, %v39, 0
    %65 = vmatpush.bf16.msra.mxu0 0
    %66 = vmatpush.bf16.msra.mxu0 0
    %67 = vmatpush.bf16.msra.mxu0 0
    %68 = vmatpush.bf16.msra.mxu0 0
    %69 = vmatpush.bf16.msra.mxu0 0
    %70 = vmatpush.bf16.msra.mxu0 %v54
    %71 = vmatpush.bf16.msra.mxu0 %v53
    %72 = vmatpush.bf16.msra.mxu0 %v52
    %73 = vmatmul.bf16.gmra.mxu0 %v60
    %v74 = vpop.f32.mrf.mxu0
    %v75 = vadd.f32 %v28, %v74
    %v76 = vpop.f32.mrf.mxu0
    %v77 = vadd.f32 %v28, %v76
    %78 = vmatmul.bf16.gmra.mxu0 %v63
    %v79 = vpop.f32.mrf.mxu0
    %v80 = vadd.f32 %v28, %v79
    %v81 = vpop.f32.mrf.mxu0
    %v82 = vadd.f32 %v28, %v81
    %83 = vdwg.mxu0
    %v84 = vpack.c.bf16 %v75, %v75
    %v85 = vpack.c.bf16 %v77, %v77
    %v86 = vpack.c.bf16 %v80, %v80
    %v87 = vpack.c.bf16 %v82, %v82
    %vm88 = vcmask 781312
    %89 = vst.msk [vmem:[#allocation2] sm:$0xf] %vm88, %v84
    %90 = vst.msk [vmem:[#allocation2 + $0x4] sm:$0xf] %vm88, %v85
    %91 = vst.msk [vmem:[#allocation2 + $0x8] sm:$0xf] %vm88, %v86
    %92 = vst.msk [vmem:[#allocation2 + $0xc] sm:$0xf] %vm88, %v87
    // Predicated region
    $region14: #{patch_embed_forward.1} parent=1 // pred_check
      _
    $region15: #{patch_embed_forward.1} parent=1 // pred_check_branch
      %94 = sbr.rel (0) target = $region17
    $region16: #{patch_embed_forward.1} parent=1 // pred_region
      %96 = vsyncadd [#allocation3], 0
      %s97 = sshll.u32 [#allocation2], 4
      %s98 = int_to_ptr.vmem [resolvable:$true] %s97
      %s99 = sshll.u32 %s3, 4
      %s100 = int_to_ptr.hbm [resolvable:$true] %s99
      %105 = dma.vmem_to_hbm [thread:$0]  %s98, 256, %s100, [#allocation3], 64, 64, 4
    $region17: #{patch_embed_forward.1} parent=1 // pred_fallthru
      _
    // Predicated region
    $region18: #{patch_embed_forward.1} parent=1 // pred_check
      _
    $region19: #{patch_embed_forward.1} parent=1 // pred_check_branch
      %107 = sbr.rel (0) target = $region21
    $region20: #{patch_embed_forward.1} parent=1 // pred_region
      %109 = dma.done [#allocation3], 256
    $region21: #{patch_embed_forward.1} parent=1 // pred_fallthru
      _
    %110 = vsyncpa [#allocation3], 1

</llo_original>
